<compile_context>
chip_gen: v5e
topology: v5e:2x2
jax: 0.10.0
libtpu: 0.0.40
codegen_flags: <defaults>
</compile_context>

<pallas_src>
import jax
import jax.numpy as jnp
from jax.experimental import pallas as pl
from jax.experimental.pallas import tpu as pltpu

N, H, W = 2, 16, 16
CIN, COUT = 4, 8
LANES = W * COUT          # 128
EPS = 1e-5


def unet_block_kernel(lhs1_ref, w1_ref, w2_ref, params_ref, out_ref, lhs2_ref):
    inv_count = 1.0 / float(N * H * W)

    # Row index (for per-image halo masking), broadcast over lanes.
    row = jax.lax.broadcasted_iota(jnp.int32, (N * H, LANES), 0)

    def channel_sum(x):
        # (N*H, 128) -> (1, 128): per-channel sums broadcast to all 16
        # same-channel lane slots via a lane-roll reduction tree (XLU slot,
        # no MXU issue). Lane j holds channel j % COUT; slots repeat every
        # COUT lanes, so rolls of 8/16/32/64 cover all 16 slots.
        s = jnp.sum(x, axis=0, keepdims=True)
        s = s + pltpu.roll(s, COUT, 1)
        s = s + pltpu.roll(s, 2 * COUT, 1)
        s = s + pltpu.roll(s, 4 * COUT, 1)
        s = s + pltpu.roll(s, 8 * COUT, 1)
        return s

    def relu_bn(y, bias_t, gamma_t, beta_t):
        h = jnp.maximum(y + bias_t, 0.0)
        # Two-pass batch stats (numerically safe): mean, then biased variance
        # of the centered values.
        mean = channel_sum(h) * inv_count
        centered = h - mean
        var = channel_sum(centered * centered) * inv_count
        scale = gamma_t * jax.lax.rsqrt(var + EPS)
        return centered * scale + beta_t

    b1t, g1t, bt1t = params_ref[0:1, :], params_ref[1:2, :], params_ref[2:3, :]
    b2t, g2t, bt2t = params_ref[3:4, :], params_ref[4:5, :], params_ref[5:6, :]

    # ---- conv1: single lane-dense matmul (32,192)@(192,128) -> (32,128) ----
    y1 = jnp.dot(lhs1_ref[...], w1_ref[...], preferred_element_type=jnp.float32)
    h1 = relu_bn(y1, b1t, g1t, bt1t)

    # ---- conv2 LHS: three dy-shifted copies of h1 (1-row H halo) built with
    # sublane rolls + boundary masks, stored as three full aligned tiles. ----
    top_row = (row & (H - 1)) == 0          # first row of each image
    bot_row = (row & (H - 1)) == (H - 1)    # last row of each image
    # pltpu.roll matches jnp.roll: result[r] = x[(r - shift) mod (N*H)].
    h1_dym1 = jnp.where(top_row, 0.0, pltpu.roll(h1, 1, 0))          # h1[r-1]
    h1_dyp1 = jnp.where(bot_row, 0.0, pltpu.roll(h1, N * H - 1, 0))  # h1[r+1]
    lhs2_ref[:, 0:LANES] = h1_dym1
    lhs2_ref[:, LANES:2 * LANES] = h1
    lhs2_ref[:, 2 * LANES:3 * LANES] = h1_dyp1

    # ---- conv2: single banded matmul (32,384)@(384,128) -> (32,128) ----
    y2 = jnp.dot(lhs2_ref[...], w2_ref[...], preferred_element_type=jnp.float32)
    out_ref[...] = relu_bn(y2, b2t, g2t, bt2t)


def _band_weight(w_hwio, width):
    """(3,3,cin,cout) -> (3*width*cin, width*cout) banded conv-along-W matrix
    (the band edges encode the zero padding on the W axis)."""
    cin, cout = w_hwio.shape[2], w_hwio.shape[3]
    wx = jnp.arange(width)
    dx = wx[:, None] - wx[None, :] + 1                       # (wx, w) -> kx
    valid = ((dx >= 0) & (dx <= 2)).astype(w_hwio.dtype)
    dxc = jnp.clip(dx, 0, 2)
    g = w_hwio[:, dxc, :, :]                                 # (3, wx, w, ci, co)
    g = g * valid[None, :, :, None, None]
    g = jnp.transpose(g, (0, 1, 3, 2, 4))                    # (3, wx, ci, w, co)
    return g.reshape(3 * width * cin, width * cout)


def unet_conv_block(x_nchw, w1_oihw, b1, g1, bt1, w2_oihw, b2, g2, bt2):
    """Forward pass matching the PyTorch module. Input/output are NCHW f32."""
    x = jnp.transpose(x_nchw, (0, 2, 3, 1)).astype(jnp.float32)    # NHWC
    xpad_h = jnp.pad(x, ((0, 0), (1, 1), (0, 0), (0, 0)))          # pad H only

    # conv1 LHS (H-halo im2col) built in the wrapper: (N*H, 3*W*CIN) = (32,192)
    cols = jnp.stack([xpad_h[:, dy:dy + H] for dy in range(3)], axis=2)
    lhs1 = cols.reshape(N * H, 3 * W * CIN)

    w1big = _band_weight(jnp.transpose(w1_oihw, (2, 3, 1, 0)), W)  # (192,128)
    w2big = _band_weight(jnp.transpose(w2_oihw, (2, 3, 1, 0)), W)  # (384,128)

    tile = lambda v: jnp.tile(v.astype(jnp.float32), W)            # (128,)
    zrow = jnp.zeros((LANES,), jnp.float32)
    params = jnp.stack([tile(b1), tile(g1), tile(bt1),
                        tile(b2), tile(g2), tile(bt2), zrow, zrow])  # (8,128)

    vmem = pl.BlockSpec(memory_space=pltpu.MemorySpace.VMEM)
    out_flat = pl.pallas_call(
        unet_block_kernel,
        out_shape=jax.ShapeDtypeStruct((N * H, LANES), jnp.float32),
        in_specs=[vmem, vmem, vmem, vmem],
        out_specs=vmem,
        scratch_shapes=[pltpu.VMEM((N * H, 3 * LANES), jnp.float32)],
    )(lhs1, w1big, w2big, params)

    out_nhwc = out_flat.reshape(N, H, W, COUT)
    return jnp.transpose(out_nhwc, (0, 3, 1, 2))                   # back to NCHW


def reference_forward(x_nchw, w1_oihw, b1, g1, bt1, w2_oihw, b2, g2, bt2):
    """Pure-JAX reference mirroring nn.Sequential(Conv,ReLU,BN,Conv,ReLU,BN)."""
    def conv(x, w, b):
        y = jax.lax.conv_general_dilated(
            x, w, (1, 1), 'SAME',
            dimension_numbers=('NCHW', 'OIHW', 'NCHW'))
        return y + b[None, :, None, None]

    def bn(x, g, bt):
        mu = jnp.mean(x, axis=(0, 2, 3), keepdims=True)
        var = jnp.mean((x - mu) ** 2, axis=(0, 2, 3), keepdims=True)
        return (g[None, :, None, None] * (x - mu) / jnp.sqrt(var + EPS)
                + bt[None, :, None, None])

    h = bn(jnp.maximum(conv(x_nchw, w1_oihw, b1), 0.0), g1, bt1)
    h = bn(jnp.maximum(conv(h, w2_oihw, b2), 0.0), g2, bt2)
    return h


if __name__ == "__main__":
    key = jax.random.PRNGKey(0)
    kx, kw1, kb1, kw2, kb2 = jax.random.split(key, 5)

    x = jax.random.normal(kx, (N, CIN, H, W), dtype=jnp.float32)

    # Conv2d params (PyTorch layout OIHW); deterministic synthetic init.
    fan1 = CIN * 9
    w1 = jax.random.uniform(kw1, (COUT, CIN, 3, 3), jnp.float32,
                            -1.0 / jnp.sqrt(fan1), 1.0 / jnp.sqrt(fan1))
    b1 = jax.random.uniform(kb1, (COUT,), jnp.float32,
                            -1.0 / jnp.sqrt(fan1), 1.0 / jnp.sqrt(fan1))
    fan2 = COUT * 9
    w2 = jax.random.uniform(kw2, (COUT, COUT, 3, 3), jnp.float32,
                            -1.0 / jnp.sqrt(fan2), 1.0 / jnp.sqrt(fan2))
    b2 = jax.random.uniform(kb2, (COUT,), jnp.float32,
                            -1.0 / jnp.sqrt(fan2), 1.0 / jnp.sqrt(fan2))

    # BatchNorm2d default init: gamma=1, beta=0.
    g1 = jnp.ones((COUT,), jnp.float32)
    bt1 = jnp.zeros((COUT,), jnp.float32)
    g2 = jnp.ones((COUT,), jnp.float32)
    bt2 = jnp.zeros((COUT,), jnp.float32)

    out = unet_conv_block(x, w1, b1, g1, bt1, w2, b2, g2, bt2)
    out = jax.block_until_ready(out)

    ref = reference_forward(x, w1, b1, g1, bt1, w2, b2, g2, bt2)
    assert out.shape == (N, COUT, H, W)
    assert jnp.allclose(out, ref, atol=1e-3, rtol=1e-3), (
        float(jnp.max(jnp.abs(out - ref))))

    print("KERNEL_OK")
</pallas_src>

<mosaic_0001>
module attributes {stable_mosaic.version = 11 : i64} {
  func.func @unet_block_kernel(%arg0: memref<32x192xf32, #tpu.memory_space<vmem>>, %arg1: memref<192x128xf32, #tpu.memory_space<vmem>>, %arg2: memref<384x128xf32, #tpu.memory_space<vmem>>, %arg3: memref<8x128xf32, #tpu.memory_space<vmem>>, %arg4: memref<32x128xf32, #tpu.memory_space<vmem>>, %arg5: memref<32x384xf32, #tpu.memory_space<vmem>>) attributes {dimension_semantics = [], scalar_prefetch = 0 : i64, scratch_operands = 1 : i64, tpu.core_type = #tpu.core_type<tc>} {
    %0 = tpu.iota {dimensions = array<i32: 0>} : vector<32x128xi32>
    %c0 = arith.constant 0 : index
    %c0_0 = arith.constant 0 : index
    %1 = vector.load %arg3[%c0, %c0_0] : memref<8x128xf32, #tpu.memory_space<vmem>>, vector<1x128xf32>
    %c1 = arith.constant 1 : index
    %c0_1 = arith.constant 0 : index
    %2 = vector.load %arg3[%c1, %c0_1] : memref<8x128xf32, #tpu.memory_space<vmem>>, vector<1x128xf32>
    %c2 = arith.constant 2 : index
    %c0_2 = arith.constant 0 : index
    %3 = vector.load %arg3[%c2, %c0_2] : memref<8x128xf32, #tpu.memory_space<vmem>>, vector<1x128xf32>
    %c3 = arith.constant 3 : index
    %c0_3 = arith.constant 0 : index
    %4 = vector.load %arg3[%c3, %c0_3] : memref<8x128xf32, #tpu.memory_space<vmem>>, vector<1x128xf32>
    %c4 = arith.constant 4 : index
    %c0_4 = arith.constant 0 : index
    %5 = vector.load %arg3[%c4, %c0_4] : memref<8x128xf32, #tpu.memory_space<vmem>>, vector<1x128xf32>
    %c5 = arith.constant 5 : index
    %c0_5 = arith.constant 0 : index
    %6 = vector.load %arg3[%c5, %c0_5] : memref<8x128xf32, #tpu.memory_space<vmem>>, vector<1x128xf32>
    %c0_6 = arith.constant 0 : index
    %c0_7 = arith.constant 0 : index
    %7 = vector.load %arg0[%c0_6, %c0_7] : memref<32x192xf32, #tpu.memory_space<vmem>>, vector<32x192xf32>
    %c0_8 = arith.constant 0 : index
    %c0_9 = arith.constant 0 : index
    %8 = vector.load %arg1[%c0_8, %c0_9] : memref<192x128xf32, #tpu.memory_space<vmem>>, vector<192x128xf32>
    %cst = arith.constant dense<0.000000e+00> : vector<32x128xf32>
    %9 = tpu.matmul %7, %8, %cst {dimension_numbers = #tpu.dot_dimension_numbers<[1], [0], [0], [1], [0, 0, 1, 1], [], []>} : vector<32x192xf32>, vector<192x128xf32>, vector<32x128xf32> -> vector<32x128xf32>
    %10 = vector.broadcast %1 : vector<1x128xf32> to vector<32x128xf32>
    %11 = arith.addf %9, %10 : vector<32x128xf32>
    %cst_10 = arith.constant 0.000000e+00 : f32
    %12 = vector.broadcast %cst_10 : f32 to vector<32x128xf32>
    %13 = arith.maximumf %11, %12 : vector<32x128xf32>
    %cst_11 = arith.constant dense<0.000000e+00> : vector<128xf32>
    %14 = vector.multi_reduction <add>, %13, %cst_11 [0] : vector<32x128xf32> to vector<128xf32>
    %15 = vector.shape_cast %14 : vector<128xf32> to vector<1x128xf32>
    %c8_i32 = arith.constant 8 : i32
    %16 = tpu.dynamic_rotate %15 by %c8_i32 dim 1 : vector<1x128xf32>, i32 -> vector<1x128xf32>
    %17 = arith.addf %15, %16 : vector<1x128xf32>
    %c16_i32 = arith.constant 16 : i32
    %18 = tpu.dynamic_rotate %17 by %c16_i32 dim 1 : vector<1x128xf32>, i32 -> vector<1x128xf32>
    %19 = arith.addf %17, %18 : vector<1x128xf32>
    %c32_i32 = arith.constant 32 : i32
    %20 = tpu.dynamic_rotate %19 by %c32_i32 dim 1 : vector<1x128xf32>, i32 -> vector<1x128xf32>
    %21 = arith.addf %19, %20 : vector<1x128xf32>
    %c64_i32 = arith.constant 64 : i32
    %22 = tpu.dynamic_rotate %21 by %c64_i32 dim 1 : vector<1x128xf32>, i32 -> vector<1x128xf32>
    %23 = arith.addf %21, %22 : vector<1x128xf32>
    %cst_12 = arith.constant 0.001953125 : f32
    %24 = vector.broadcast %cst_12 : f32 to vector<1x128xf32>
    %25 = arith.mulf %23, %24 : vector<1x128xf32>
    %26 = vector.broadcast %25 : vector<1x128xf32> to vector<32x128xf32>
    %27 = arith.subf %13, %26 : vector<32x128xf32>
    %28 = arith.mulf %27, %27 : vector<32x128xf32>
    %cst_13 = arith.constant dense<0.000000e+00> : vector<128xf32>
    %29 = vector.multi_reduction <add>, %28, %cst_13 [0] : vector<32x128xf32> to vector<128xf32>
    %30 = vector.shape_cast %29 : vector<128xf32> to vector<1x128xf32>
    %c8_i32_14 = arith.constant 8 : i32
    %31 = tpu.dynamic_rotate %30 by %c8_i32_14 dim 1 : vector<1x128xf32>, i32 -> vector<1x128xf32>
    %32 = arith.addf %30, %31 : vector<1x128xf32>
    %c16_i32_15 = arith.constant 16 : i32
    %33 = tpu.dynamic_rotate %32 by %c16_i32_15 dim 1 : vector<1x128xf32>, i32 -> vector<1x128xf32>
    %34 = arith.addf %32, %33 : vector<1x128xf32>
    %c32_i32_16 = arith.constant 32 : i32
    %35 = tpu.dynamic_rotate %34 by %c32_i32_16 dim 1 : vector<1x128xf32>, i32 -> vector<1x128xf32>
    %36 = arith.addf %34, %35 : vector<1x128xf32>
    %c64_i32_17 = arith.constant 64 : i32
    %37 = tpu.dynamic_rotate %36 by %c64_i32_17 dim 1 : vector<1x128xf32>, i32 -> vector<1x128xf32>
    %38 = arith.addf %36, %37 : vector<1x128xf32>
    %cst_18 = arith.constant 0.001953125 : f32
    %39 = vector.broadcast %cst_18 : f32 to vector<1x128xf32>
    %40 = arith.mulf %38, %39 : vector<1x128xf32>
    %cst_19 = arith.constant 9.99999974E-6 : f32
    %41 = vector.broadcast %cst_19 : f32 to vector<1x128xf32>
    %42 = arith.addf %40, %41 : vector<1x128xf32>
    %43 = math.rsqrt %42 : vector<1x128xf32>
    %44 = arith.mulf %2, %43 : vector<1x128xf32>
    %45 = vector.broadcast %44 : vector<1x128xf32> to vector<32x128xf32>
    %46 = arith.mulf %27, %45 : vector<32x128xf32>
    %47 = vector.broadcast %3 : vector<1x128xf32> to vector<32x128xf32>
    %48 = arith.addf %46, %47 : vector<32x128xf32>
    %c15_i32 = arith.constant 15 : i32
    %49 = vector.broadcast %c15_i32 : i32 to vector<32x128xi32>
    %50 = arith.andi %0, %49 : vector<32x128xi32>
    %c0_i32 = arith.constant 0 : i32
    %51 = vector.broadcast %c0_i32 : i32 to vector<32x128xi32>
    %52 = arith.cmpi eq, %50, %51 : vector<32x128xi32>
    %c15_i32_20 = arith.constant 15 : i32
    %53 = vector.broadcast %c15_i32_20 : i32 to vector<32x128xi32>
    %54 = arith.andi %0, %53 : vector<32x128xi32>
    %c15_i32_21 = arith.constant 15 : i32
    %55 = vector.broadcast %c15_i32_21 : i32 to vector<32x128xi32>
    %56 = arith.cmpi eq, %54, %55 : vector<32x128xi32>
    %c1_i32 = arith.constant 1 : i32
    %57 = tpu.dynamic_rotate %48 by %c1_i32 dim 0 : vector<32x128xf32>, i32 -> vector<32x128xf32>
    %cst_22 = arith.constant 0.000000e+00 : f32
    %58 = vector.broadcast %cst_22 : f32 to vector<32x128xf32>
    %59 = arith.select %52, %58, %57 : vector<32x128xi1>, vector<32x128xf32>
    %c31_i32 = arith.constant 31 : i32
    %60 = tpu.dynamic_rotate %48 by %c31_i32 dim 0 : vector<32x128xf32>, i32 -> vector<32x128xf32>
    %cst_23 = arith.constant 0.000000e+00 : f32
    %61 = vector.broadcast %cst_23 : f32 to vector<32x128xf32>
    %62 = arith.select %56, %61, %60 : vector<32x128xi1>, vector<32x128xf32>
    %c0_24 = arith.constant 0 : index
    %c0_25 = arith.constant 0 : index
    %63 = vector.load %arg5[%c0_24, %c0_25] : memref<32x384xf32, #tpu.memory_space<vmem>>, vector<32x128xf32>
    tpu.vector_store %arg5[%c0_24, %c0_25], %59 {strides = array<i32>} : memref<32x384xf32, #tpu.memory_space<vmem>>, vector<32x128xf32>,
    %c0_26 = arith.constant 0 : index
    %c128 = arith.constant 128 : index
    %64 = vector.load %arg5[%c0_26, %c128] : memref<32x384xf32, #tpu.memory_space<vmem>>, vector<32x128xf32>
    tpu.vector_store %arg5[%c0_26, %c128], %48 {strides = array<i32>} : memref<32x384xf32, #tpu.memory_space<vmem>>, vector<32x128xf32>,
    %c0_27 = arith.constant 0 : index
    %c256 = arith.constant 256 : index
    %65 = vector.load %arg5[%c0_27, %c256] : memref<32x384xf32, #tpu.memory_space<vmem>>, vector<32x128xf32>
    tpu.vector_store %arg5[%c0_27, %c256], %62 {strides = array<i32>} : memref<32x384xf32, #tpu.memory_space<vmem>>, vector<32x128xf32>,
    %c0_28 = arith.constant 0 : index
    %c0_29 = arith.constant 0 : index
    %66 = vector.load %arg5[%c0_28, %c0_29] : memref<32x384xf32, #tpu.memory_space<vmem>>, vector<32x384xf32>
    %c0_30 = arith.constant 0 : index
    %c0_31 = arith.constant 0 : index
    %67 = vector.load %arg2[%c0_30, %c0_31] : memref<384x128xf32, #tpu.memory_space<vmem>>, vector<384x128xf32>
    %cst_32 = arith.constant dense<0.000000e+00> : vector<32x128xf32>
    %68 = tpu.matmul %66, %67, %cst_32 {dimension_numbers = #tpu.dot_dimension_numbers<[1], [0], [0], [1], [0, 0, 1, 1], [], []>} : vector<32x384xf32>, vector<384x128xf32>, vector<32x128xf32> -> vector<32x128xf32>
    %69 = vector.broadcast %4 : vector<1x128xf32> to vector<32x128xf32>
    %70 = arith.addf %68, %69 : vector<32x128xf32>
    %cst_33 = arith.constant 0.000000e+00 : f32
    %71 = vector.broadcast %cst_33 : f32 to vector<32x128xf32>
    %72 = arith.maximumf %70, %71 : vector<32x128xf32>
    %cst_34 = arith.constant dense<0.000000e+00> : vector<128xf32>
    %73 = vector.multi_reduction <add>, %72, %cst_34 [0] : vector<32x128xf32> to vector<128xf32>
    %74 = vector.shape_cast %73 : vector<128xf32> to vector<1x128xf32>
    %c8_i32_35 = arith.constant 8 : i32
    %75 = tpu.dynamic_rotate %74 by %c8_i32_35 dim 1 : vector<1x128xf32>, i32 -> vector<1x128xf32>
    %76 = arith.addf %74, %75 : vector<1x128xf32>
    %c16_i32_36 = arith.constant 16 : i32
    %77 = tpu.dynamic_rotate %76 by %c16_i32_36 dim 1 : vector<1x128xf32>, i32 -> vector<1x128xf32>
    %78 = arith.addf %76, %77 : vector<1x128xf32>
    %c32_i32_37 = arith.constant 32 : i32
    %79 = tpu.dynamic_rotate %78 by %c32_i32_37 dim 1 : vector<1x128xf32>, i32 -> vector<1x128xf32>
    %80 = arith.addf %78, %79 : vector<1x128xf32>
    %c64_i32_38 = arith.constant 64 : i32
    %81 = tpu.dynamic_rotate %80 by %c64_i32_38 dim 1 : vector<1x128xf32>, i32 -> vector<1x128xf32>
    %82 = arith.addf %80, %81 : vector<1x128xf32>
    %cst_39 = arith.constant 0.001953125 : f32
    %83 = vector.broadcast %cst_39 : f32 to vector<1x128xf32>
    %84 = arith.mulf %82, %83 : vector<1x128xf32>
    %85 = vector.broadcast %84 : vector<1x128xf32> to vector<32x128xf32>
    %86 = arith.subf %72, %85 : vector<32x128xf32>
    %87 = arith.mulf %86, %86 : vector<32x128xf32>
    %cst_40 = arith.constant dense<0.000000e+00> : vector<128xf32>
    %88 = vector.multi_reduction <add>, %87, %cst_40 [0] : vector<32x128xf32> to vector<128xf32>
    %89 = vector.shape_cast %88 : vector<128xf32> to vector<1x128xf32>
    %c8_i32_41 = arith.constant 8 : i32
    %90 = tpu.dynamic_rotate %89 by %c8_i32_41 dim 1 : vector<1x128xf32>, i32 -> vector<1x128xf32>
    %91 = arith.addf %89, %90 : vector<1x128xf32>
    %c16_i32_42 = arith.constant 16 : i32
    %92 = tpu.dynamic_rotate %91 by %c16_i32_42 dim 1 : vector<1x128xf32>, i32 -> vector<1x128xf32>
    %93 = arith.addf %91, %92 : vector<1x128xf32>
    %c32_i32_43 = arith.constant 32 : i32
    %94 = tpu.dynamic_rotate %93 by %c32_i32_43 dim 1 : vector<1x128xf32>, i32 -> vector<1x128xf32>
    %95 = arith.addf %93, %94 : vector<1x128xf32>
    %c64_i32_44 = arith.constant 64 : i32
    %96 = tpu.dynamic_rotate %95 by %c64_i32_44 dim 1 : vector<1x128xf32>, i32 -> vector<1x128xf32>
    %97 = arith.addf %95, %96 : vector<1x128xf32>
    %cst_45 = arith.constant 0.001953125 : f32
    %98 = vector.broadcast %cst_45 : f32 to vector<1x128xf32>
    %99 = arith.mulf %97, %98 : vector<1x128xf32>
    %cst_46 = arith.constant 9.99999974E-6 : f32
    %100 = vector.broadcast %cst_46 : f32 to vector<1x128xf32>
    %101 = arith.addf %99, %100 : vector<1x128xf32>
    %102 = math.rsqrt %101 : vector<1x128xf32>
    %103 = arith.mulf %5, %102 : vector<1x128xf32>
    %104 = vector.broadcast %103 : vector<1x128xf32> to vector<32x128xf32>
    %105 = arith.mulf %86, %104 : vector<32x128xf32>
    %106 = vector.broadcast %6 : vector<1x128xf32> to vector<32x128xf32>
    %107 = arith.addf %105, %106 : vector<32x128xf32>
    %c0_47 = arith.constant 0 : index
    %c0_48 = arith.constant 0 : index
    %108 = vector.load %arg4[%c0_47, %c0_48] : memref<32x128xf32, #tpu.memory_space<vmem>>, vector<32x128xf32>
    tpu.vector_store %arg4[%c0_47, %c0_48], %107 {strides = array<i32>} : memref<32x128xf32, #tpu.memory_space<vmem>>, vector<32x128xf32>,
    return
  }
}

</mosaic_0001>

<llo_original>
// kernel: tpu_custom_call.1
$region0: #{tpu_custom_call.1}
  #allocation0 [shape = 'u32[]', space=smem, size = 0x4, offset = 0x4, fixed_abs, tag = 'smem constant byte address 0x4 - core index']
  #allocation1 [shape = 'u32[72,128]{1,0:T(1,128)}', space=vmem, size = 0x9000, scoped, tag = 'internal scratch']
  #allocation2 [shape = 'f32[32,384]{1,0:T(8,128)}', space=vmem, size = 0xc000, scoped, tag = 'scratch operand']
  %s0 = inlined_call_operand.hbm [shape: f32[32,192], index: 0, kind: input, shape index: {}]
  %s1 = inlined_call_operand.hbm [shape: f32[192,128], index: 1, kind: input, shape index: {}]
  %s2 = inlined_call_operand.hbm [shape: f32[384,128], index: 2, kind: input, shape index: {}]
  %s3 = inlined_call_operand.hbm [shape: f32[8,128], index: 3, kind: input, shape index: {}]
  %s4 = inlined_call_operand.hbm [shape: f32[32,128], index: 4, kind: output, shape index: {}]
  %s5 = sld [smem:[#allocation0]]
  $region42: #{tpu_custom_call.1} parent=0
    _
  %s7 = ssub.s32 1, %s5
  %s8 = scalar_select 0, %s7, %s5
  $region1: #{tpu_custom_call.1} parent=0
    #allocation3 [shape = 'u8[32768]{0}', space=vmem, size = 0x8000, scoped, tag = 'input window, operand 0, single buffered']
    #allocation4 [shape = 's32[1]{0}', space=sflag, size = 0x4, scoped, tag = 'scoped memory for tpu_custom_call.1']
    #allocation5 [shape = 's32[1]{0}', space=sflag, size = 0x4, scoped, tag = 'scoped memory for tpu_custom_call.1']
    #allocation6 [shape = 'u8[98304]{0}', space=vmem, size = 0x18000, scoped, tag = 'input window, operand 1, single buffered']
    #allocation7 [shape = 's32[1]{0}', space=sflag, size = 0x4, scoped, tag = 'scoped memory for tpu_custom_call.1']
    #allocation8 [shape = 'u8[196608]{0}', space=vmem, size = 0x30000, scoped, tag = 'input window, operand 2, single buffered']
    #allocation9 [shape = 'u8[4096]{0}', space=vmem, size = 0x1000, scoped, tag = 'input window, operand 3, single buffered']
    #allocation10 [shape = 's32[1]{0}', space=sflag, size = 0x4, scoped, tag = 'scoped memory for tpu_custom_call.1']
    #allocation11 [shape = 'u8[16384]{0}', space=vmem, size = 0x4000, scoped, tag = 'output window, operand 0, single buffered']
    %9 = vsyncpa [#allocation4], 0
    %10 = vsyncpa [#allocation7], 0
    %11 = vsyncpa [#allocation10], 0
    %12 = vsyncpa [#allocation5], 0
    // Predicated region
    $region2: #{tpu_custom_call.1} parent=1 // pred_check
      _
    $region3: #{tpu_custom_call.1} parent=1 // pred_check_branch
      %14 = sbr.rel (0) target = $region5
    $region4: #{tpu_custom_call.1} parent=1 // pred_region
      %16 = vsyncadd [#allocation4], 0
      %s17 = sshll.u32 %s0, 4
      %s18 = int_to_ptr.hbm [resolvable:$true] %s17
      %s19 = sshll.u32 [#allocation3], 4
      %s20 = int_to_ptr.vmem [resolvable:$true] %s19
      %25 = dma.hbm_to_vmem [thread:$0]  %s18, 1024, %s20, [#allocation4], 256, 256, 16
    $region5: #{tpu_custom_call.1} parent=1 // pred_fallthru
      _
    // Predicated region
    $region6: #{tpu_custom_call.1} parent=1 // pred_check
      _
    $region7: #{tpu_custom_call.1} parent=1 // pred_check_branch
      %27 = sbr.rel (0) target = $region9
    $region8: #{tpu_custom_call.1} parent=1 // pred_region
      %29 = vsyncadd [#allocation7], 0
      %s30 = sshll.u32 %s1, 4
      %s31 = int_to_ptr.hbm [resolvable:$true] %s30
      %s32 = sshll.u32 [#allocation6], 4
      %s33 = int_to_ptr.vmem [resolvable:$true] %s32
      %38 = dma.hbm_to_vmem [thread:$0]  %s31, 3072, %s33, [#allocation7], 128, 128, 8
    $region9: #{tpu_custom_call.1} parent=1 // pred_fallthru
      _
    // Predicated region
    $region10: #{tpu_custom_call.1} parent=1 // pred_check
      _
    $region11: #{tpu_custom_call.1} parent=1 // pred_check_branch
      %40 = sbr.rel (0) target = $region13
    $region12: #{tpu_custom_call.1} parent=1 // pred_region
      %42 = vsyncadd [#allocation7], 0
      %s43 = sshll.u32 %s2, 4
      %s44 = int_to_ptr.hbm [resolvable:$true] %s43
      %s45 = sshll.u32 [#allocation8], 4
      %s46 = int_to_ptr.vmem [resolvable:$true] %s45
      %51 = dma.hbm_to_vmem [thread:$0]  %s44, 6144, %s46, [#allocation7], 128, 128, 8
    $region13: #{tpu_custom_call.1} parent=1 // pred_fallthru
      _
    // Predicated region
    $region14: #{tpu_custom_call.1} parent=1 // pred_check
      _
    $region15: #{tpu_custom_call.1} parent=1 // pred_check_branch
      %53 = sbr.rel (0) target = $region17
    $region16: #{tpu_custom_call.1} parent=1 // pred_region
      %55 = vsyncadd [#allocation10], 0
      %s57 = sshll.u32 %s3, 4
      %s58 = int_to_ptr.hbm [resolvable:$true] %s57
      %s59 = sshll.u32 [#allocation9], 4
      %s60 = int_to_ptr.vmem [resolvable:$true] %s59
      %62 = dma.hbm_to_vmem [thread:$0]  %s58, 128, %s60, [#allocation10]
    $region17: #{tpu_custom_call.1} parent=1 // pred_fallthru
      _
    // Predicated region
    $region18: #{tpu_custom_call.1} parent=1 // pred_check
      _
    $region19: #{tpu_custom_call.1} parent=1 // pred_check_branch
      %64 = sbr.rel (0) target = $region21
    $region20: #{tpu_custom_call.1} parent=1 // pred_region
      %66 = dma.done [#allocation4], 1024
    $region21: #{tpu_custom_call.1} parent=1 // pred_fallthru
      _
    // Predicated region
    $region22: #{tpu_custom_call.1} parent=1 // pred_check
      _
    $region23: #{tpu_custom_call.1} parent=1 // pred_check_branch
      %68 = sbr.rel (0) target = $region25
    $region24: #{tpu_custom_call.1} parent=1 // pred_region
      %70 = dma.done [#allocation7], 3072
    $region25: #{tpu_custom_call.1} parent=1 // pred_fallthru
      _
    // Predicated region
    $region26: #{tpu_custom_call.1} parent=1 // pred_check
      _
    $region27: #{tpu_custom_call.1} parent=1 // pred_check_branch
      %72 = sbr.rel (0) target = $region29
    $region28: #{tpu_custom_call.1} parent=1 // pred_region
      %74 = dma.done [#allocation7], 6144
    $region29: #{tpu_custom_call.1} parent=1 // pred_fallthru
      _
    // Predicated region
    $region30: #{tpu_custom_call.1} parent=1 // pred_check
      _
    $region31: #{tpu_custom_call.1} parent=1 // pred_check_branch
      %76 = sbr.rel (0) target = $region33
    $region32: #{tpu_custom_call.1} parent=1 // pred_region
      %78 = dma.done [#allocation10], 128
    $region33: #{tpu_custom_call.1} parent=1 // pred_fallthru
      _
    %v79 = vlaneseq
    %v80 = vshrl.u32 %v79, 7
    %v81 = vadd.s32 %v80, 8
    %v82 = vadd.s32 %v80, 16
    %v83 = vadd.s32 %v80, 24
    %v84 = vld [vmem:[#allocation9] sm:$0x1]
    %v85 = vld [vmem:[#allocation9 + $0x1] sm:$0x1]
    %v86 = vld [vmem:[#allocation9 + $0x2] sm:$0x1]
    %v87 = vld [vmem:[#allocation9 + $0x3] sm:$0x1]
    %v88 = vld [vmem:[#allocation9 + $0x4] sm:$0x1]
    %v89 = vld [vmem:[#allocation9 + $0x5] sm:$0x1]
    %v90 = vld [vmem:[#allocation3] sm:$0xff]
    %v91 = vld [vmem:[#allocation3 + $0x8] sm:$0xff]
    %v92 = vld [vmem:[#allocation3 + $0x10] sm:$0xff]
    %v93 = vld [vmem:[#allocation3 + $0x18] sm:$0xff]
    %v94 = vld [vmem:[#allocation3 + $0x20] sm:$0xff]
    %v95 = vld [vmem:[#allocation3 + $0x28] sm:$0xff]
    %v96 = vld [vmem:[#allocation3 + $0x30] sm:$0xff]
    %v97 = vld [vmem:[#allocation3 + $0x38] sm:$0xff]
    %v98 = vld [vmem:[#allocation6] sm:$0xff]
    %v99 = vld [vmem:[#allocation6 + $0x8] sm:$0xff]
    %v100 = vld [vmem:[#allocation6 + $0x10] sm:$0xff]
    %v101 = vld [vmem:[#allocation6 + $0x18] sm:$0xff]
    %v102 = vld [vmem:[#allocation6 + $0x20] sm:$0xff]
    %v103 = vld [vmem:[#allocation6 + $0x28] sm:$0xff]
    %v104 = vld [vmem:[#allocation6 + $0x30] sm:$0xff]
    %v105 = vld [vmem:[#allocation6 + $0x38] sm:$0xff]
    %v106 = vld [vmem:[#allocation6 + $0x40] sm:$0xff]
    %v107 = vld [vmem:[#allocation6 + $0x48] sm:$0xff]
    %v108 = vld [vmem:[#allocation6 + $0x50] sm:$0xff]
    %v109 = vld [vmem:[#allocation6 + $0x58] sm:$0xff]
    %v110 = vld [vmem:[#allocation6 + $0x60] sm:$0xff]
    %v111 = vld [vmem:[#allocation6 + $0x68] sm:$0xff]
    %v112 = vld [vmem:[#allocation6 + $0x70] sm:$0xff]
    %v113 = vld [vmem:[#allocation6 + $0x78] sm:$0xff]
    %v114 = vld [vmem:[#allocation6 + $0x80] sm:$0xff]
    %v115 = vld [vmem:[#allocation6 + $0x88] sm:$0xff]
    %v116 = vld [vmem:[#allocation6 + $0x90] sm:$0xff]
    %v117 = vld [vmem:[#allocation6 + $0x98] sm:$0xff]
    %v118 = vld [vmem:[#allocation6 + $0xa0] sm:$0xff]
    %v119 = vld [vmem:[#allocation6 + $0xa8] sm:$0xff]
    %v120 = vld [vmem:[#allocation6 + $0xb0] sm:$0xff]
    %v121 = vld [vmem:[#allocation6 + $0xb8] sm:$0xff]
    %v122 = vperm.slane %v84, 0
    %vm123 = vcmask 523264
    %v125 = vsel %vm123, %v91, 0
    %v128 = vsel %vm123, %v93, 0
    %v131 = vsel %vm123, %v95, 0
    %v134 = vsel %vm123, %v97, 0
    %136 = vmatpush.msra.mxu0 %v113
    %137 = vmatpush.msra.mxu0 %v112
    %138 = vmatpush.msra.mxu0 %v111
    %139 = vmatpush.msra.mxu0 %v110
    %140 = vmatpush.msra.mxu0 %v109
    %141 = vmatpush.msra.mxu0 %v108
    %142 = vmatpush.msra.mxu0 %v107
    %143 = vmatpush.msra.mxu0 %v106
    %144 = vmatpush.msra.mxu0 %v105
    %145 = vmatpush.msra.mxu0 %v104
    %146 = vmatpush.msra.mxu0 %v103
    %147 = vmatpush.msra.mxu0 %v102
    %148 = vmatpush.msra.mxu0 %v101
    %149 = vmatpush.msra.mxu0 %v100
    %150 = vmatpush.msra.mxu0 %v99
    %151 = vmatpush.msra.mxu0 %v98
    %152 = vmatmul.f32.gmra.mxu0 %v90
    %v153 = vpop.f32.mrf.mxu0
    %v154 = vadd.f32 %v122, %v153
    %155 = vmatmul.f32.gmra.mxu0 %v92
    %v156 = vpop.f32.mrf.mxu0
    %v157 = vadd.f32 %v122, %v156
    %158 = vmatmul.f32.gmra.mxu0 %v94
    %v159 = vpop.f32.mrf.mxu0
    %v160 = vadd.f32 %v122, %v159
    %161 = vmatmul.f32.gmra.mxu0 %v96
    %v162 = vpop.f32.mrf.mxu0
    %v163 = vadd.f32 %v122, %v162
    %164 = vdwg.mxu0
    %165 = vmatpush.msra.mxu0 0.0
    %166 = vmatpush.msra.mxu0 0.0
    %167 = vmatpush.msra.mxu0 0.0
    %168 = vmatpush.msra.mxu0 0.0
    %169 = vmatpush.msra.mxu0 0.0
    %170 = vmatpush.msra.mxu0 0.0
    %171 = vmatpush.msra.mxu0 0.0
    %172 = vmatpush.msra.mxu0 0.0
    %173 = vmatpush.msra.mxu0 %v121
    %174 = vmatpush.msra.mxu0 %v120
    %175 = vmatpush.msra.mxu0 %v119
    %176 = vmatpush.msra.mxu0 %v118
    %177 = vmatpush.msra.mxu0 %v117
    %178 = vmatpush.msra.mxu0 %v116
    %179 = vmatpush.msra.mxu0 %v115
    %180 = vmatpush.msra.mxu0 %v114
    %181 = vmatmul.f32.gmra.mxu0 %v125
    %v182 = vpop.f32.mrf.mxu0
    %v183 = vadd.f32 %v154, %v182
    %184 = vmatmul.f32.gmra.mxu0 %v128
    %v185 = vpop.f32.mrf.mxu0
    %v186 = vadd.f32 %v157, %v185
    %187 = vmatmul.f32.gmra.mxu0 %v131
    %v188 = vpop.f32.mrf.mxu0
    %v189 = vadd.f32 %v160, %v188
    %190 = vmatmul.f32.gmra.mxu0 %v134
    %v191 = vpop.f32.mrf.mxu0
    %v192 = vadd.f32 %v163, %v191
    %193 = vdwg.mxu0
    %v194 = vmax.f32 %v183, 0.0
    %v195 = vmax.f32 %v186, 0.0
    %v196 = vmax.f32 %v189, 0.0
    %v197 = vmax.f32 %v192, 0.0
    %v198 = vadd.f32 %v194, %v195
    %v199 = vadd.f32 %v198, %v196
    %v200 = vadd.f32 %v199, %v197
    %v201 = vrot.slane %v200, 4
    %v202 = vadd.f32 %v200, %v201
    %v203 = vrot.slane %v202, 2
    %v204 = vadd.f32 %v202, %v203
    %v205 = vrot.slane %v204, 1
    %v206 = vadd.f32 %v204, %v205
    %207 = vrot.lane.b32.xlu0 %v206, 8
    %v208 = vpop.permute.xlu0 %207
    %v209 = vadd.f32 %v206, %v208
    %210 = vrot.lane.b32.xlu0 %v209, 16
    %v211 = vpop.permute.xlu0 %210
    %v212 = vadd.f32 %v209, %v211
    %213 = vrot.lane.b32.xlu0 %v212, 32
    %v214 = vpop.permute.xlu0 %213
    %v215 = vadd.f32 %v212, %v214
    %216 = vrot.lane.b32.xlu0 %v215, 64
    %v217 = vpop.permute.xlu0 %216
    %v218 = vadd.f32 %v215, %v217
    %v219 = vmul.f32 %v218, 0.001953125
    %v220 = vperm.slane %v219, 0
    %v221 = vsub.f32 %v194, %v220
    %v222 = vsub.f32 %v195, %v220
    %v223 = vsub.f32 %v196, %v220
    %v224 = vsub.f32 %v197, %v220
    %v225 = vmul.f32 %v221, %v221
    %v226 = vmul.f32 %v222, %v222
    %v227 = vmul.f32 %v223, %v223
    %v228 = vmul.f32 %v224, %v224
    %v229 = vadd.f32 %v225, %v226
    %v230 = vadd.f32 %v229, %v227
    %v231 = vadd.f32 %v230, %v228
    %v232 = vrot.slane %v231, 4
    %v233 = vadd.f32 %v231, %v232
    %v234 = vrot.slane %v233, 2
    %v235 = vadd.f32 %v233, %v234
    %v236 = vrot.slane %v235, 1
    %v237 = vadd.f32 %v235, %v236
    %238 = vrot.lane.b32.xlu0 %v237, 8
    %v239 = vpop.permute.xlu0 %238
    %v240 = vadd.f32 %v237, %v239
    %241 = vrot.lane.b32.xlu0 %v240, 16
    %v242 = vpop.permute.xlu0 %241
    %v243 = vadd.f32 %v240, %v242
    %244 = vrot.lane.b32.xlu0 %v243, 32
    %v245 = vpop.permute.xlu0 %244
    %v246 = vadd.f32 %v243, %v245
    %247 = vrot.lane.b32.xlu0 %v246, 64
    %v248 = vpop.permute.xlu0 %247
    %v249 = vadd.f32 %v246, %v248
    %v250 = vmul.f32 %v249, 0.001953125
    %v251 = vadd.f32 %v250, 1e-05
    %v252 = vrsqrt.pop %v251
    %v253 = vmul.f32 %v252, %v251
    %v254 = vmul.f32 %v253, %v252
    %v255 = vmul.f32 0.5, %v254
    %v256 = vsub.f32 1.5, %v255
    %v257 = vmul.f32 %v252, %v256
    %vm258 = vweird.f32 %v251
    %vm259 = vweird.f32 %v252
    %vm260 = vmor %vm258, %vm259
    %v261 = vsel %vm260, %v252, %v257
    %v262 = vmul.f32 %v85, %v261
    %v263 = vperm.slane %v262, 0
    %v264 = vmul.f32 %v221, %v263
    %v265 = vmul.f32 %v222, %v263
    %v266 = vmul.f32 %v223, %v263
    %v267 = vmul.f32 %v224, %v263
    %v268 = vperm.slane %v86, 0
    %v269 = vadd.f32 %v264, %v268
    %v270 = vadd.f32 %v265, %v268
    %v271 = vadd.f32 %v266, %v268
    %v272 = vadd.f32 %v267, %v268
    %v273 = vand.u32 %v80, 15
    %v274 = vand.u32 %v81, 15
    %v275 = vand.u32 %v82, 15
    %v276 = vand.u32 %v83, 15
    %vm277 = vcmp.eq.s32.totalorder %v273, 0
    %vm278 = vcmp.eq.s32.totalorder %v274, 0
    %vm279 = vcmp.eq.s32.totalorder %v275, 0
    %vm280 = vcmp.eq.s32.totalorder %v276, 0
    %vm281 = vcmp.eq.s32.totalorder %v273, 15
    %vm282 = vcmp.eq.s32.totalorder %v274, 15
    %vm283 = vcmp.eq.s32.totalorder %v275, 15
    %vm284 = vcmp.eq.s32.totalorder %v276, 15
    %v285 = vrot.slane %v269, 7
    %v286 = vrot.slane %v270, 7
    %v287 = vrot.slane %v271, 7
    %v288 = vrot.slane %v272, 7
    %vm289 = vcmp.lt.s32.totalorder %v80, 1
    %v290 = vsel %vm289, %v287, %v288
    %v291 = vsel %vm289, %v286, %v287
    %v292 = vsel %vm289, %v285, %v286
    %v293 = vsel %vm289, %v288, %v285
    %v294 = vsel %vm277, 0.0, %v293
    %v295 = vsel %vm278, 0.0, %v292
    %v296 = vsel %vm279, 0.0, %v291
    %v297 = vsel %vm280, 0.0, %v290
    %v298 = vrot.slane %v269, 1
    %v299 = vrot.slane %v270, 1
    %v300 = vrot.slane %v271, 1
    %v301 = vrot.slane %v272, 1
    %vm302 = vcmp.lt.s32.totalorder %v80, 7
    %v303 = vsel %vm302, %v300, %v301
    %v304 = vsel %vm302, %v299, %v300
    %v305 = vsel %vm302, %v298, %v299
    %v306 = vsel %vm302, %v301, %v298
    %v307 = vsel %vm281, 0.0, %v305
    %v308 = vsel %vm282, 0.0, %v304
    %v309 = vsel %vm283, 0.0, %v303
    %v310 = vsel %vm284, 0.0, %v306
    %311 = vst [vmem:[#allocation2] sm:$0xff] %v294
    %312 = vst [vmem:[#allocation2 + $0x18] sm:$0xff] %v295
    %313 = vst [vmem:[#allocation2 + $0x30] sm:$0xff] %v296
    %314 = vst [vmem:[#allocation2 + $0x48] sm:$0xff] %v297
    %315 = vst [vmem:[#allocation2 + $0x8] sm:$0xff] %v269
    %316 = vst [vmem:[#allocation2 + $0x20] sm:$0xff] %v270
    %317 = vst [vmem:[#allocation2 + $0x38] sm:$0xff] %v271
    %318 = vst [vmem:[#allocation2 + $0x50] sm:$0xff] %v272
    %319 = vst [vmem:[#allocation2 + $0x10] sm:$0xff] %v307
    %320 = vst [vmem:[#allocation2 + $0x28] sm:$0xff] %v308
    %321 = vst [vmem:[#allocation2 + $0x40] sm:$0xff] %v309
    %322 = vst [vmem:[#allocation2 + $0x58] sm:$0xff] %v310
    %v323 = vld [vmem:[#allocation2] sm:$0xff]
    %v324 = vld [vmem:[#allocation2 + $0x8] sm:$0xff]
    %v325 = vld [vmem:[#allocation2 + $0x10] sm:$0xff]
    %v326 = vld [vmem:[#allocation2 + $0x18] sm:$0xff]
    %v327 = vld [vmem:[#allocation2 + $0x20] sm:$0xff]
    %v328 = vld [vmem:[#allocation2 + $0x28] sm:$0xff]
    %v329 = vld [vmem:[#allocation2 + $0x30] sm:$0xff]
    %v330 = vld [vmem:[#allocation2 + $0x38] sm:$0xff]
    %v331 = vld [vmem:[#allocation2 + $0x40] sm:$0xff]
    %v332 = vld [vmem:[#allocation2 + $0x48] sm:$0xff]
    %v333 = vld [vmem:[#allocation2 + $0x50] sm:$0xff]
    %v334 = vld [vmem:[#allocation2 + $0x58] sm:$0xff]
    %v335 = vld [vmem:[#allocation8] sm:$0xff]
    %v336 = vld [vmem:[#allocation8 + $0x8] sm:$0xff]
    %v337 = vld [vmem:[#allocation8 + $0x10] sm:$0xff]
    %v338 = vld [vmem:[#allocation8 + $0x18] sm:$0xff]
    %v339 = vld [vmem:[#allocation8 + $0x20] sm:$0xff]
    %v340 = vld [vmem:[#allocation8 + $0x28] sm:$0xff]
    %v341 = vld [vmem:[#allocation8 + $0x30] sm:$0xff]
    %v342 = vld [vmem:[#allocation8 + $0x38] sm:$0xff]
    %v343 = vld [vmem:[#allocation8 + $0x40] sm:$0xff]
    %v344 = vld [vmem:[#allocation8 + $0x48] sm:$0xff]
    %v345 = vld [vmem:[#allocation8 + $0x50] sm:$0xff]
    %v346 = vld [vmem:[#allocation8 + $0x58] sm:$0xff]
    %v347 = vld [vmem:[#allocation8 + $0x60] sm:$0xff]
    %v348 = vld [vmem:[#allocation8 + $0x68] sm:$0xff]
    %v349 = vld [vmem:[#allocation8 + $0x70] sm:$0xff]
    %v350 = vld [vmem:[#allocation8 + $0x78] sm:$0xff]
    %v351 = vld [vmem:[#allocation8 + $0x80] sm:$0xff]
    %v352 = vld [vmem:[#allocation8 + $0x88] sm:$0xff]
    %v353 = vld [vmem:[#allocation8 + $0x90] sm:$0xff]
    %v354 = vld [vmem:[#allocation8 + $0x98] sm:$0xff]
    %v355 = vld [vmem:[#allocation8 + $0xa0] sm:$0xff]
    %v356 = vld [vmem:[#allocation8 + $0xa8] sm:$0xff]
    %v357 = vld [vmem:[#allocation8 + $0xb0] sm:$0xff]
    %v358 = vld [vmem:[#allocation8 + $0xb8] sm:$0xff]
    %v359 = vld [vmem:[#allocation8 + $0xc0] sm:$0xff]
    %v360 = vld [vmem:[#allocation8 + $0xc8] sm:$0xff]
    %v361 = vld [vmem:[#allocation8 + $0xd0] sm:$0xff]
    %v362 = vld [vmem:[#allocation8 + $0xd8] sm:$0xff]
    %v363 = vld [vmem:[#allocation8 + $0xe0] sm:$0xff]
    %v364 = vld [vmem:[#allocation8 + $0xe8] sm:$0xff]
    %v365 = vld [vmem:[#allocation8 + $0xf0] sm:$0xff]
    %v366 = vld [vmem:[#allocation8 + $0xf8] sm:$0xff]
    %v367 = vld [vmem:[#allocation8 + $0x100] sm:$0xff]
    %v368 = vld [vmem:[#allocation8 + $0x108] sm:$0xff]
    %v369 = vld [vmem:[#allocation8 + $0x110] sm:$0xff]
    %v370 = vld [vmem:[#allocation8 + $0x118] sm:$0xff]
    %v371 = vld [vmem:[#allocation8 + $0x120] sm:$0xff]
    %v372 = vld [vmem:[#allocation8 + $0x128] sm:$0xff]
    %v373 = vld [vmem:[#allocation8 + $0x130] sm:$0xff]
    %v374 = vld [vmem:[#allocation8 + $0x138] sm:$0xff]
    %v375 = vld [vmem:[#allocation8 + $0x140] sm:$0xff]
    %v376 = vld [vmem:[#allocation8 + $0x148] sm:$0xff]
    %v377 = vld [vmem:[#allocation8 + $0x150] sm:$0xff]
    %v378 = vld [vmem:[#allocation8 + $0x158] sm:$0xff]
    %v379 = vld [vmem:[#allocation8 + $0x160] sm:$0xff]
    %v380 = vld [vmem:[#allocation8 + $0x168] sm:$0xff]
    %v381 = vld [vmem:[#allocation8 + $0x170] sm:$0xff]
    %v382 = vld [vmem:[#allocation8 + $0x178] sm:$0xff]
    %v383 = vperm.slane %v87, 0
    %384 = vmatpush.msra.mxu0 %v350
    %385 = vmatpush.msra.mxu0 %v349
    %386 = vmatpush.msra.mxu0 %v348
    %387 = vmatpush.msra.mxu0 %v347
    %388 = vmatpush.msra.mxu0 %v346
    %389 = vmatpush.msra.mxu0 %v345
    %390 = vmatpush.msra.mxu0 %v344
    %391 = vmatpush.msra.mxu0 %v343
    %392 = vmatpush.msra.mxu0 %v342
    %393 = vmatpush.msra.mxu0 %v341
    %394 = vmatpush.msra.mxu0 %v340
    %395 = vmatpush.msra.mxu0 %v339
    %396 = vmatpush.msra.mxu0 %v338
    %397 = vmatpush.msra.mxu0 %v337
    %398 = vmatpush.msra.mxu0 %v336
    %399 = vmatpush.msra.mxu0 %v335
    %400 = vmatmul.f32.gmra.mxu0 %v323
    %v401 = vpop.f32.mrf.mxu0
    %v402 = vadd.f32 %v383, %v401
    %403 = vmatmul.f32.gmra.mxu0 %v326
    %v404 = vpop.f32.mrf.mxu0
    %v405 = vadd.f32 %v383, %v404
    %406 = vmatmul.f32.gmra.mxu0 %v329
    %v407 = vpop.f32.mrf.mxu0
    %v408 = vadd.f32 %v383, %v407
    %409 = vmatmul.f32.gmra.mxu0 %v332
    %v410 = vpop.f32.mrf.mxu0
    %v411 = vadd.f32 %v383, %v410
    %412 = vdwg.mxu0
    %413 = vmatpush.msra.mxu0 %v366
    %414 = vmatpush.msra.mxu0 %v365
    %415 = vmatpush.msra.mxu0 %v364
    %416 = vmatpush.msra.mxu0 %v363
    %417 = vmatpush.msra.mxu0 %v362
    %418 = vmatpush.msra.mxu0 %v361
    %419 = vmatpush.msra.mxu0 %v360
    %420 = vmatpush.msra.mxu0 %v359
    %421 = vmatpush.msra.mxu0 %v358
    %422 = vmatpush.msra.mxu0 %v357
    %423 = vmatpush.msra.mxu0 %v356
    %424 = vmatpush.msra.mxu0 %v355
    %425 = vmatpush.msra.mxu0 %v354
    %426 = vmatpush.msra.mxu0 %v353
    %427 = vmatpush.msra.mxu0 %v352
    %428 = vmatpush.msra.mxu0 %v351
    %429 = vmatmul.f32.gmra.mxu0 %v324
    %v430 = vpop.f32.mrf.mxu0
    %v431 = vadd.f32 %v402, %v430
    %432 = vmatmul.f32.gmra.mxu0 %v327
    %v433 = vpop.f32.mrf.mxu0
    %v434 = vadd.f32 %v405, %v433
    %435 = vmatmul.f32.gmra.mxu0 %v330
    %v436 = vpop.f32.mrf.mxu0
    %v437 = vadd.f32 %v408, %v436
    %438 = vmatmul.f32.gmra.mxu0 %v333
    %v439 = vpop.f32.mrf.mxu0
    %v440 = vadd.f32 %v411, %v439
    %441 = vdwg.mxu0
    %442 = vmatpush.msra.mxu0 %v382
    %443 = vmatpush.msra.mxu0 %v381
    %444 = vmatpush.msra.mxu0 %v380
    %445 = vmatpush.msra.mxu0 %v379
    %446 = vmatpush.msra.mxu0 %v378
    %447 = vmatpush.msra.mxu0 %v377
    %448 = vmatpush.msra.mxu0 %v376
    %449 = vmatpush.msra.mxu0 %v375
    %450 = vmatpush.msra.mxu0 %v374
    %451 = vmatpush.msra.mxu0 %v373
    %452 = vmatpush.msra.mxu0 %v372
    %453 = vmatpush.msra.mxu0 %v371
    %454 = vmatpush.msra.mxu0 %v370
    %455 = vmatpush.msra.mxu0 %v369
    %456 = vmatpush.msra.mxu0 %v368
    %457 = vmatpush.msra.mxu0 %v367
    %458 = vmatmul.f32.gmra.mxu0 %v325
    %v459 = vpop.f32.mrf.mxu0
    %v460 = vadd.f32 %v431, %v459
    %461 = vmatmul.f32.gmra.mxu0 %v328
    %v462 = vpop.f32.mrf.mxu0
    %v463 = vadd.f32 %v434, %v462
    %464 = vmatmul.f32.gmra.mxu0 %v331
    %v465 = vpop.f32.mrf.mxu0
    %v466 = vadd.f32 %v437, %v465
    %467 = vmatmul.f32.gmra.mxu0 %v334
    %v468 = vpop.f32.mrf.mxu0
    %v469 = vadd.f32 %v440, %v468
    %470 = vdwg.mxu0
    %v471 = vmax.f32 %v460, 0.0
    %v472 = vmax.f32 %v463, 0.0
    %v473 = vmax.f32 %v466, 0.0
    %v474 = vmax.f32 %v469, 0.0
    %v475 = vadd.f32 %v471, %v472
    %v476 = vadd.f32 %v475, %v473
    %v477 = vadd.f32 %v476, %v474
    %v478 = vrot.slane %v477, 4
    %v479 = vadd.f32 %v477, %v478
    %v480 = vrot.slane %v479, 2
    %v481 = vadd.f32 %v479, %v480
    %v482 = vrot.slane %v481, 1
    %v483 = vadd.f32 %v481, %v482
    %484 = vrot.lane.b32.xlu0 %v483, 8
    %v485 = vpop.permute.xlu0 %484
    %v486 = vadd.f32 %v483, %v485
    %487 = vrot.lane.b32.xlu0 %v486, 16
    %v488 = vpop.permute.xlu0 %487
    %v489 = vadd.f32 %v486, %v488
    %490 = vrot.lane.b32.xlu0 %v489, 32
    %v491 = vpop.permute.xlu0 %490
    %v492 = vadd.f32 %v489, %v491
    %493 = vrot.lane.b32.xlu0 %v492, 64
    %v494 = vpop.permute.xlu0 %493
    %v495 = vadd.f32 %v492, %v494
    %v496 = vmul.f32 %v495, 0.001953125
    %v497 = vperm.slane %v496, 0
    %v498 = vsub.f32 %v471, %v497
    %v499 = vsub.f32 %v472, %v497
    %v500 = vsub.f32 %v473, %v497
    %v501 = vsub.f32 %v474, %v497
    %v502 = vmul.f32 %v498, %v498
    %v503 = vmul.f32 %v499, %v499
    %v504 = vmul.f32 %v500, %v500
    %v505 = vmul.f32 %v501, %v501
    %v506 = vadd.f32 %v502, %v503
    %v507 = vadd.f32 %v506, %v504
    %v508 = vadd.f32 %v507, %v505
    %v509 = vrot.slane %v508, 4
    %v510 = vadd.f32 %v508, %v509
    %v511 = vrot.slane %v510, 2
    %v512 = vadd.f32 %v510, %v511
    %v513 = vrot.slane %v512, 1
    %v514 = vadd.f32 %v512, %v513
    %515 = vrot.lane.b32.xlu0 %v514, 8
    %v516 = vpop.permute.xlu0 %515
    %v517 = vadd.f32 %v514, %v516
    %518 = vrot.lane.b32.xlu0 %v517, 16
    %v519 = vpop.permute.xlu0 %518
    %v520 = vadd.f32 %v517, %v519
    %521 = vrot.lane.b32.xlu0 %v520, 32
    %v522 = vpop.permute.xlu0 %521
    %v523 = vadd.f32 %v520, %v522
    %524 = vrot.lane.b32.xlu0 %v523, 64
    %v525 = vpop.permute.xlu0 %524
    %v526 = vadd.f32 %v523, %v525
    %v527 = vmul.f32 %v526, 0.001953125
    %v528 = vadd.f32 %v527, 1e-05
    %v529 = vrsqrt.pop %v528
    %v530 = vmul.f32 %v529, %v528
    %v531 = vmul.f32 %v530, %v529
    %v532 = vmul.f32 0.5, %v531
    %v533 = vsub.f32 1.5, %v532
    %v534 = vmul.f32 %v529, %v533
    %vm535 = vweird.f32 %v528
    %vm536 = vweird.f32 %v529
    %vm537 = vmor %vm535, %vm536
    %v538 = vsel %vm537, %v529, %v534
    %v539 = vmul.f32 %v88, %v538
    %v540 = vperm.slane %v539, 0
    %v541 = vmul.f32 %v498, %v540
    %v542 = vmul.f32 %v499, %v540
    %v543 = vmul.f32 %v500, %v540
    %v544 = vmul.f32 %v501, %v540
    %v545 = vperm.slane %v89, 0
    %v546 = vadd.f32 %v541, %v545
    %v547 = vadd.f32 %v542, %v545
    %v548 = vadd.f32 %v543, %v545
    %v549 = vadd.f32 %v544, %v545
    %550 = vst [vmem:[#allocation11] sm:$0xff] %v546
    %551 = vst [vmem:[#allocation11 + $0x8] sm:$0xff] %v547
    %552 = vst [vmem:[#allocation11 + $0x10] sm:$0xff] %v548
    %553 = vst [vmem:[#allocation11 + $0x18] sm:$0xff] %v549
    // Predicated region
    $region34: #{tpu_custom_call.1} parent=1 // pred_check
      _
    $region35: #{tpu_custom_call.1} parent=1 // pred_check_branch
      %555 = sbr.rel (0) target = $region37
    $region36: #{tpu_custom_call.1} parent=1 // pred_region
      %557 = vsyncadd [#allocation5], 0
      %s558 = sshll.u32 [#allocation11], 4
      %s559 = int_to_ptr.vmem [resolvable:$true] %s558
      %s560 = sshll.u32 %s4, 4
      %s561 = int_to_ptr.hbm [resolvable:$true] %s560
      %566 = dma.vmem_to_hbm [thread:$0]  %s559, 512, %s561, [#allocation5], 128, 128, 8
    $region37: #{tpu_custom_call.1} parent=1 // pred_fallthru
      _
    // Predicated region
    $region38: #{tpu_custom_call.1} parent=1 // pred_check
      _
    $region39: #{tpu_custom_call.1} parent=1 // pred_check_branch
      %568 = sbr.rel (0) target = $region41
    $region40: #{tpu_custom_call.1} parent=1 // pred_region
      %570 = dma.done [#allocation5], 512
    $region41: #{tpu_custom_call.1} parent=1 // pred_fallthru
      _
    %571 = vsyncpa [#allocation4], 1
    %572 = vsyncpa [#allocation7], 1
    %573 = vsyncpa [#allocation10], 1
    %574 = vsyncpa [#allocation5], 1

</llo_original>
